<compile_context>
chip_gen: v6e
topology: v6e:2x2x1
jax: 0.10.0
libtpu: 0.0.40
codegen_flags: <defaults>
</compile_context>

<pallas_src>
import functools

import jax
import jax.numpy as jnp
from jax import lax
from jax.experimental import pallas as pl
from jax.experimental.pallas import tpu as pltpu

_LANES = 128
_SUBLANES = 8
_MAX_BLOCK_ROWS = 2048   # (2048, 128) f32 tile = 1 MiB; 3 inputs x 2 buffers = 6 MiB VMEM
_NUM_CORES = 2           # leading "parallel" grid axis: both TCs on v7x, serial elsewhere


def _cdiv(a, b):
    return -(-a // b)


class _Stream:
    """Static tiling metadata for one flattened input stream."""

    def __init__(self, n):
        self.n = int(n)
        rows = max(_SUBLANES, _cdiv(self.n, _LANES))   # at least one (8,128) row group
        self.rows = rows
        self.block_rows = min(_MAX_BLOCK_ROWS, (rows // _SUBLANES) * _SUBLANES)
        self.nt = _cdiv(rows, self.block_rows)
        self.valid_last = rows - (self.nt - 1) * self.block_rows
        self.partial = self.valid_last != self.block_rows
        # Elements the kernel accumulates beyond the n real ones (explicit zero pad
        # + masked tail rows of the final partial tile).  Each contributes exactly
        # softplus(0) = log(2) to the softplus sums and 0 to the plain sums.
        self.pad_elems = self.nt * self.block_rows * _LANES - self.n

    def prep(self, x):
        flat = jnp.ravel(x)
        total = self.rows * _LANES
        if total != flat.size:
            # Only the sub-(8x128) remainder is ever padded (<= 1023 zeros);
            # block-aligned inputs pass through as a zero-copy reshape.
            flat = jnp.pad(flat, (0, total - flat.size))
        return flat.reshape(self.rows, _LANES)


def _make_kernel(tpc, lab, unl, cnf, up):
    total_steps = _NUM_CORES * tpc

    def _fold(v, block_rows):
        # (block_rows, 128) -> (8, 128) via plain vreg adds (VALU only; no XLU reduce).
        return jnp.sum(v.reshape(block_rows // _SUBLANES, _SUBLANES, _LANES), axis=0)

    def _mask_rows(x, valid_rows):
        row = lax.broadcasted_iota(jnp.int32, x.shape, 0)
        return jnp.where(row < valid_rows, x, 0.0)

    def kernel(lab_ref, unl_ref, conf_ref,
               t_acc, x_acc, ax_acc, unl_acc, conf_acc):
        c = pl.program_id(0)
        i = pl.program_id(1)
        t = c * tpc + i                      # global tile index owned by this step

        @pl.when(i == 0)
        def _init():
            t_acc[...] = jnp.zeros_like(t_acc)
            x_acc[...] = jnp.zeros_like(x_acc)
            ax_acc[...] = jnp.zeros_like(ax_acc)
            unl_acc[...] = jnp.zeros_like(unl_acc)
            conf_acc[...] = jnp.zeros_like(conf_acc)

        def _dispatch(stream, body):
            # Run body(valid_rows_or_None) on every step owning a tile of `stream`;
            # only the final (partial) tile pays for the row mask.
            nt = stream.nt
            if stream.partial:
                pl.when(t == nt - 1)(lambda: body(stream.valid_last))
                if nt > 1:
                    pl.when(t < nt - 1)(lambda: body(None))
            elif nt == total_steps:
                body(None)
            else:
                pl.when(t < nt)(lambda: body(None))

        def _labeled(valid_rows):
            x = lab_ref[...].astype(jnp.float32)
            if valid_rows is not None:
                x = _mask_rows(x, valid_rows)
            ax = jnp.abs(x)
            tl = jnp.log1p(jnp.exp(-ax))     # shared softplus tail term
            # Glue reconstructs: sum softplus(+-x) = (sum|x| +- sum x)/2 + sum t
            t_acc[...] += _fold(tl, lab.block_rows)
            x_acc[...] += _fold(x, lab.block_rows)
            ax_acc[...] += _fold(ax, lab.block_rows)

        def _unlabeled(valid_rows):
            x = unl_ref[...].astype(jnp.float32)
            if valid_rows is not None:
                x = _mask_rows(x, valid_rows)
            xs = -x if up else x             # static target sign: +1 if UP else -1
            sp = jnp.maximum(xs, 0.0) + jnp.log1p(jnp.exp(-jnp.abs(x)))
            unl_acc[...] += _fold(sp, unl.block_rows)

        def _conf(valid_rows):
            x = conf_ref[...].astype(jnp.float32)
            if valid_rows is not None:
                x = _mask_rows(x, valid_rows)
            conf_acc[...] += _fold(x, cnf.block_rows)

        _dispatch(lab, _labeled)
        _dispatch(unl, _unlabeled)
        _dispatch(cnf, _conf)

    return kernel


def cu_loss(conf, labeled, unlabeled, *, beta, up, non):
    """Pallas-backed CULoss.forward (up == conf.mean() > 0.5 captured at init)."""
    if conf.size == 0 or labeled.size == 0 or unlabeled.size == 0:
        raise ValueError("CULoss inputs must be non-empty")

    lab, unl, cnf = _Stream(labeled.size), _Stream(unlabeled.size), _Stream(conf.size)

    grid_len = max(lab.nt, unl.nt, cnf.nt)
    tpc = _cdiv(grid_len, _NUM_CORES)        # tiles per core
    total_steps = _NUM_CORES * tpc

    def _in_map(stream):
        nt = stream.nt
        if nt == total_steps:
            return lambda c, i: (c * tpc + i, 0)
        # Clamp: once this stream is exhausted its block index stops changing,
        # so the pipeline skips the redundant DMA; the body is pl.when-gated off.
        return lambda c, i, _nt=nt: (jnp.minimum(c * tpc + i, _nt - 1), 0)

    kernel = _make_kernel(tpc, lab, unl, cnf, up)

    acc_shape = jax.ShapeDtypeStruct((_NUM_CORES, _SUBLANES, _LANES), jnp.float32)
    acc_spec = pl.BlockSpec((None, _SUBLANES, _LANES), lambda c, i: (c, 0, 0))

    outs = pl.pallas_call(
        kernel,
        out_shape=(acc_shape,) * 5,
        grid_spec=pltpu.PrefetchScalarGridSpec(
            num_scalar_prefetch=0,
            grid=(_NUM_CORES, tpc),
            in_specs=[
                pl.BlockSpec((lab.block_rows, _LANES), _in_map(lab)),
                pl.BlockSpec((unl.block_rows, _LANES), _in_map(unl)),
                pl.BlockSpec((cnf.block_rows, _LANES), _in_map(cnf)),
            ],
            out_specs=(acc_spec,) * 5,
        ),
        compiler_params=pltpu.CompilerParams(
            dimension_semantics=("parallel", "arbitrary"),  # per-core accumulators; i is the reduction
        ),
    )(lab.prep(labeled), unl.prep(unlabeled), cnf.prep(conf))

    # Tiny jitted glue: fold the per-core (8,128) partials and undo the padding term.
    s_t, s_x, s_ax, s_unl, s_conf = [jnp.sum(o, dtype=jnp.float32) for o in outs]

    log2 = jnp.log1p(jnp.exp(jnp.float32(0.0)))      # f32 softplus(0), what padded zeros accumulated
    s_t = s_t - jnp.float32(lab.pad_elems) * log2
    s_unl = s_unl - jnp.float32(unl.pad_elems) * log2

    n_lab = jnp.float32(lab.n)
    sum_sp_neg = 0.5 * (s_ax - s_x) + s_t            # sum softplus(-labeled)
    sum_sp_pos = 0.5 * (s_ax + s_x) + s_t            # sum softplus(+labeled)

    y_conf_pos = sum_sp_neg / n_lab                  # SoftMarginLoss(labeled, +1)
    y_conf_neg = sum_sp_pos / n_lab                  # SoftMarginLoss(labeled, -1)
    mean_conf = s_conf / jnp.float32(cnf.n)
    unl_mean = s_unl / jnp.float32(unl.n)            # SoftMarginLoss(unlabeled, +1 if up else -1)

    if up:
        unlabeled_risk = beta * unl_mean
        neg_risk = (1.0 - mean_conf) * y_conf_neg
        pos_risk = (mean_conf - beta) * y_conf_pos + unlabeled_risk
    else:
        unlabeled_risk = beta * unl_mean
        pos_risk = mean_conf * y_conf_pos
        neg_risk = (1.0 - beta - mean_conf) * y_conf_neg + unlabeled_risk

    if non:
        return jnp.maximum(neg_risk, 0.0) + jnp.maximum(pos_risk, 0.0)
    return neg_risk + pos_risk


def _cu_loss_ref(conf, labeled, unlabeled, *, beta, up, non):
    """Pure-JAX reference mirroring the PyTorch module exactly."""
    sml = lambda x, y: jnp.mean(jnp.log1p(jnp.exp(-y * x)))
    y_conf_pos = sml(labeled, jnp.ones_like(labeled))
    y_conf_neg = sml(labeled, -jnp.ones_like(labeled))
    if up:
        unlabeled_risk = jnp.mean(beta * sml(unlabeled, jnp.ones_like(unlabeled)))
        neg_risk = jnp.mean((1 - conf) * y_conf_neg)
        pos_risk = jnp.mean((conf - beta) * y_conf_pos) + unlabeled_risk
    else:
        unlabeled_risk = jnp.mean(beta * sml(unlabeled, -jnp.ones_like(unlabeled)))
        pos_risk = jnp.mean(conf * y_conf_pos)
        neg_risk = jnp.mean((1 - beta - conf) * y_conf_neg) + unlabeled_risk
    if non:
        return jnp.maximum(neg_risk, 0.0) + jnp.maximum(pos_risk, 0.0)
    return neg_risk + pos_risk


if __name__ == "__main__":
    key = jax.random.PRNGKey(0)
    k_conf, k_lab, k_unl = jax.random.split(key, 3)

    # Small, module-consistent shapes (per-sample confidences / discriminator logits).
    # `labeled` is deliberately NOT (8,128)-block aligned to exercise the masked tail tile.
    conf = jax.random.uniform(k_conf, (16, 64), dtype=jnp.float32)       # in [0, 1)
    labeled = jax.random.normal(k_lab, (9, 128), dtype=jnp.float32)
    unlabeled = jax.random.normal(k_unl, (32, 128), dtype=jnp.float32)

    beta = 0.5
    non = False
    # __init__-time flag: UP = conf.mean() > 0.5  (static Python config)
    up = bool(float(jnp.mean(conf)) > 0.5)

    cu = jax.jit(functools.partial(cu_loss, beta=beta, up=up, non=non))
    out = jax.block_until_ready(cu(conf, labeled, unlabeled))

    ref = _cu_loss_ref(conf, labeled, unlabeled, beta=beta, up=up, non=non)
    assert jnp.allclose(out, ref, rtol=1e-5, atol=1e-5), (out, ref)

    print("KERNEL_OK")
</pallas_src>

<mosaic_0001>
module attributes {stable_mosaic.version = 11 : i64} {
  func.func @kernel(%arg0: i32, %arg1: i32, %arg2: memref<8x128xf32, #tpu.memory_space<vmem>>, %arg3: memref<32x128xf32, #tpu.memory_space<vmem>>, %arg4: memref<8x128xf32, #tpu.memory_space<vmem>>, %arg5: memref<1x8x128xf32, #tpu.memory_space<vmem>>, %arg6: memref<1x8x128xf32, #tpu.memory_space<vmem>>, %arg7: memref<1x8x128xf32, #tpu.memory_space<vmem>>, %arg8: memref<1x8x128xf32, #tpu.memory_space<vmem>>, %arg9: memref<1x8x128xf32, #tpu.memory_space<vmem>>) attributes {dimension_semantics = [#tpu.dimension_semantics<parallel>, #tpu.dimension_semantics<arbitrary>], iteration_bounds = array<i64: 2, 1>, scalar_prefetch = 0 : i64, scratch_operands = 0 : i64, tpu.core_type = #tpu.core_type<tc>, window_params = [{transform_indices = @transform_0, window_bounds = array<i64: 8, 128>}, {transform_indices = @transform_1, window_bounds = array<i64: 32, 128>}, {transform_indices = @transform_2, window_bounds = array<i64: 8, 128>}, {transform_indices = @transform_3, window_bounds = array<i64: 1, 8, 128>}, {transform_indices = @transform_4, window_bounds = array<i64: 1, 8, 128>}, {transform_indices = @transform_5, window_bounds = array<i64: 1, 8, 128>}, {transform_indices = @transform_6, window_bounds = array<i64: 1, 8, 128>}, {transform_indices = @transform_7, window_bounds = array<i64: 1, 8, 128>}]} {
    %c1_i32 = arith.constant 1 : i32
    %0 = arith.muli %arg0, %c1_i32 : i32
    %1 = arith.addi %0, %arg1 : i32
    %c0_i32 = arith.constant 0 : i32
    %2 = arith.cmpi eq, %arg1, %c0_i32 : i32
    %3 = arith.extui %2 : i1 to i32
    %c0_i32_0 = arith.constant 0 : i32
    %4 = arith.cmpi ne, %3, %c0_i32_0 : i32
    scf.if %4 {
      %cst = arith.constant 0.000000e+00 : f32
      %17 = vector.broadcast %cst : f32 to vector<8x128xf32>
      %c0 = arith.constant 0 : index
      %c0_9 = arith.constant 0 : index
      %c0_10 = arith.constant 0 : index
      %18 = vector.load %arg5[%c0, %c0_9, %c0_10] : memref<1x8x128xf32, #tpu.memory_space<vmem>>, vector<1x8x128xf32>
      %19 = vector.shape_cast %18 : vector<1x8x128xf32> to vector<8x128xf32>
      %20 = vector.shape_cast %17 : vector<8x128xf32> to vector<1x8x128xf32>
      tpu.vector_store %arg5[%c0, %c0_9, %c0_10], %20 {strides = array<i32>} : memref<1x8x128xf32, #tpu.memory_space<vmem>>, vector<1x8x128xf32>,
      %cst_11 = arith.constant 0.000000e+00 : f32
      %21 = vector.broadcast %cst_11 : f32 to vector<8x128xf32>
      %c0_12 = arith.constant 0 : index
      %c0_13 = arith.constant 0 : index
      %c0_14 = arith.constant 0 : index
      %22 = vector.load %arg6[%c0_12, %c0_13, %c0_14] : memref<1x8x128xf32, #tpu.memory_space<vmem>>, vector<1x8x128xf32>
      %23 = vector.shape_cast %22 : vector<1x8x128xf32> to vector<8x128xf32>
      %24 = vector.shape_cast %21 : vector<8x128xf32> to vector<1x8x128xf32>
      tpu.vector_store %arg6[%c0_12, %c0_13, %c0_14], %24 {strides = array<i32>} : memref<1x8x128xf32, #tpu.memory_space<vmem>>, vector<1x8x128xf32>,
      %cst_15 = arith.constant 0.000000e+00 : f32
      %25 = vector.broadcast %cst_15 : f32 to vector<8x128xf32>
      %c0_16 = arith.constant 0 : index
      %c0_17 = arith.constant 0 : index
      %c0_18 = arith.constant 0 : index
      %26 = vector.load %arg7[%c0_16, %c0_17, %c0_18] : memref<1x8x128xf32, #tpu.memory_space<vmem>>, vector<1x8x128xf32>
      %27 = vector.shape_cast %26 : vector<1x8x128xf32> to vector<8x128xf32>
      %28 = vector.shape_cast %25 : vector<8x128xf32> to vector<1x8x128xf32>
      tpu.vector_store %arg7[%c0_16, %c0_17, %c0_18], %28 {strides = array<i32>} : memref<1x8x128xf32, #tpu.memory_space<vmem>>, vector<1x8x128xf32>,
      %cst_19 = arith.constant 0.000000e+00 : f32
      %29 = vector.broadcast %cst_19 : f32 to vector<8x128xf32>
      %c0_20 = arith.constant 0 : index
      %c0_21 = arith.constant 0 : index
      %c0_22 = arith.constant 0 : index
      %30 = vector.load %arg8[%c0_20, %c0_21, %c0_22] : memref<1x8x128xf32, #tpu.memory_space<vmem>>, vector<1x8x128xf32>
      %31 = vector.shape_cast %30 : vector<1x8x128xf32> to vector<8x128xf32>
      %32 = vector.shape_cast %29 : vector<8x128xf32> to vector<1x8x128xf32>
      tpu.vector_store %arg8[%c0_20, %c0_21, %c0_22], %32 {strides = array<i32>} : memref<1x8x128xf32, #tpu.memory_space<vmem>>, vector<1x8x128xf32>,
      %cst_23 = arith.constant 0.000000e+00 : f32
      %33 = vector.broadcast %cst_23 : f32 to vector<8x128xf32>
      %c0_24 = arith.constant 0 : index
      %c0_25 = arith.constant 0 : index
      %c0_26 = arith.constant 0 : index
      %34 = vector.load %arg9[%c0_24, %c0_25, %c0_26] : memref<1x8x128xf32, #tpu.memory_space<vmem>>, vector<1x8x128xf32>
      %35 = vector.shape_cast %34 : vector<1x8x128xf32> to vector<8x128xf32>
      %36 = vector.shape_cast %33 : vector<8x128xf32> to vector<1x8x128xf32>
      tpu.vector_store %arg9[%c0_24, %c0_25, %c0_26], %36 {strides = array<i32>} : memref<1x8x128xf32, #tpu.memory_space<vmem>>, vector<1x8x128xf32>,
    } else {
    }
    %c1_i32_1 = arith.constant 1 : i32
    %5 = arith.cmpi eq, %1, %c1_i32_1 : i32
    %6 = arith.extui %5 : i1 to i32
    %c0_i32_2 = arith.constant 0 : i32
    %7 = arith.cmpi ne, %6, %c0_i32_2 : i32
    scf.if %7 {
      %c0 = arith.constant 0 : index
      %c0_9 = arith.constant 0 : index
      %17 = vector.load %arg2[%c0, %c0_9] : memref<8x128xf32, #tpu.memory_space<vmem>>, vector<8x128xf32>
      %18 = tpu.iota {dimensions = array<i32: 0>} : vector<8x128xi32>
      %c1_i32_10 = arith.constant 1 : i32
      %19 = vector.broadcast %c1_i32_10 : i32 to vector<8x128xi32>
      %20 = arith.cmpi slt, %18, %19 : vector<8x128xi32>
      %cst = arith.constant 0.000000e+00 : f32
      %21 = vector.broadcast %cst : f32 to vector<8x128xf32>
      %22 = arith.select %20, %17, %21 : vector<8x128xi1>, vector<8x128xf32>
      %23 = math.absf %22 : vector<8x128xf32>
      %cst_11 = arith.constant 0.000000e+00 : f32
      %24 = vector.broadcast %cst_11 : f32 to vector<8x128xf32>
      %25 = arith.subf %24, %23 : vector<8x128xf32>
      %26 = math.exp %25 : vector<8x128xf32>
      %27 = math.log1p %26 : vector<8x128xf32>
      %c0_12 = arith.constant 0 : index
      %c0_13 = arith.constant 0 : index
      %c0_14 = arith.constant 0 : index
      %28 = vector.load %arg5[%c0_12, %c0_13, %c0_14] : memref<1x8x128xf32, #tpu.memory_space<vmem>>, vector<1x8x128xf32>
      %29 = vector.shape_cast %28 : vector<1x8x128xf32> to vector<8x128xf32>
      %30 = vector.shape_cast %27 : vector<8x128xf32> to vector<1x8x128xf32>
      %cst_15 = arith.constant dense<0.000000e+00> : vector<8x128xf32>
      %31 = vector.multi_reduction <add>, %30, %cst_15 [0] : vector<1x8x128xf32> to vector<8x128xf32>
      %32 = arith.addf %29, %31 : vector<8x128xf32>
      %c0_16 = arith.constant 0 : index
      %c0_17 = arith.constant 0 : index
      %c0_18 = arith.constant 0 : index
      %33 = vector.load %arg5[%c0_16, %c0_17, %c0_18] : memref<1x8x128xf32, #tpu.memory_space<vmem>>, vector<1x8x128xf32>
      %34 = vector.shape_cast %33 : vector<1x8x128xf32> to vector<8x128xf32>
      %35 = vector.shape_cast %32 : vector<8x128xf32> to vector<1x8x128xf32>
      tpu.vector_store %arg5[%c0_16, %c0_17, %c0_18], %35 {strides = array<i32>} : memref<1x8x128xf32, #tpu.memory_space<vmem>>, vector<1x8x128xf32>,
      %c0_19 = arith.constant 0 : index
      %c0_20 = arith.constant 0 : index
      %c0_21 = arith.constant 0 : index
      %36 = vector.load %arg6[%c0_19, %c0_20, %c0_21] : memref<1x8x128xf32, #tpu.memory_space<vmem>>, vector<1x8x128xf32>
      %37 = vector.shape_cast %36 : vector<1x8x128xf32> to vector<8x128xf32>
      %38 = vector.shape_cast %22 : vector<8x128xf32> to vector<1x8x128xf32>
      %cst_22 = arith.constant dense<0.000000e+00> : vector<8x128xf32>
      %39 = vector.multi_reduction <add>, %38, %cst_22 [0] : vector<1x8x128xf32> to vector<8x128xf32>
      %40 = arith.addf %37, %39 : vector<8x128xf32>
      %c0_23 = arith.constant 0 : index
      %c0_24 = arith.constant 0 : index
      %c0_25 = arith.constant 0 : index
      %41 = vector.load %arg6[%c0_23, %c0_24, %c0_25] : memref<1x8x128xf32, #tpu.memory_space<vmem>>, vector<1x8x128xf32>
      %42 = vector.shape_cast %41 : vector<1x8x128xf32> to vector<8x128xf32>
      %43 = vector.shape_cast %40 : vector<8x128xf32> to vector<1x8x128xf32>
      tpu.vector_store %arg6[%c0_23, %c0_24, %c0_25], %43 {strides = array<i32>} : memref<1x8x128xf32, #tpu.memory_space<vmem>>, vector<1x8x128xf32>,
      %c0_26 = arith.constant 0 : index
      %c0_27 = arith.constant 0 : index
      %c0_28 = arith.constant 0 : index
      %44 = vector.load %arg7[%c0_26, %c0_27, %c0_28] : memref<1x8x128xf32, #tpu.memory_space<vmem>>, vector<1x8x128xf32>
      %45 = vector.shape_cast %44 : vector<1x8x128xf32> to vector<8x128xf32>
      %46 = vector.shape_cast %23 : vector<8x128xf32> to vector<1x8x128xf32>
      %cst_29 = arith.constant dense<0.000000e+00> : vector<8x128xf32>
      %47 = vector.multi_reduction <add>, %46, %cst_29 [0] : vector<1x8x128xf32> to vector<8x128xf32>
      %48 = arith.addf %45, %47 : vector<8x128xf32>
      %c0_30 = arith.constant 0 : index
      %c0_31 = arith.constant 0 : index
      %c0_32 = arith.constant 0 : index
      %49 = vector.load %arg7[%c0_30, %c0_31, %c0_32] : memref<1x8x128xf32, #tpu.memory_space<vmem>>, vector<1x8x128xf32>
      %50 = vector.shape_cast %49 : vector<1x8x128xf32> to vector<8x128xf32>
      %51 = vector.shape_cast %48 : vector<8x128xf32> to vector<1x8x128xf32>
      tpu.vector_store %arg7[%c0_30, %c0_31, %c0_32], %51 {strides = array<i32>} : memref<1x8x128xf32, #tpu.memory_space<vmem>>, vector<1x8x128xf32>,
    } else {
    }
    %c1_i32_3 = arith.constant 1 : i32
    %8 = arith.cmpi slt, %1, %c1_i32_3 : i32
    %9 = arith.extui %8 : i1 to i32
    %c0_i32_4 = arith.constant 0 : i32
    %10 = arith.cmpi ne, %9, %c0_i32_4 : i32
    scf.if %10 {
      %c0 = arith.constant 0 : index
      %c0_9 = arith.constant 0 : index
      %17 = vector.load %arg2[%c0, %c0_9] : memref<8x128xf32, #tpu.memory_space<vmem>>, vector<8x128xf32>
      %18 = math.absf %17 : vector<8x128xf32>
      %cst = arith.constant 0.000000e+00 : f32
      %19 = vector.broadcast %cst : f32 to vector<8x128xf32>
      %20 = arith.subf %19, %18 : vector<8x128xf32>
      %21 = math.exp %20 : vector<8x128xf32>
      %22 = math.log1p %21 : vector<8x128xf32>
      %c0_10 = arith.constant 0 : index
      %c0_11 = arith.constant 0 : index
      %c0_12 = arith.constant 0 : index
      %23 = vector.load %arg5[%c0_10, %c0_11, %c0_12] : memref<1x8x128xf32, #tpu.memory_space<vmem>>, vector<1x8x128xf32>
      %24 = vector.shape_cast %23 : vector<1x8x128xf32> to vector<8x128xf32>
      %25 = vector.shape_cast %22 : vector<8x128xf32> to vector<1x8x128xf32>
      %cst_13 = arith.constant dense<0.000000e+00> : vector<8x128xf32>
      %26 = vector.multi_reduction <add>, %25, %cst_13 [0] : vector<1x8x128xf32> to vector<8x128xf32>
      %27 = arith.addf %24, %26 : vector<8x128xf32>
      %c0_14 = arith.constant 0 : index
      %c0_15 = arith.constant 0 : index
      %c0_16 = arith.constant 0 : index
      %28 = vector.load %arg5[%c0_14, %c0_15, %c0_16] : memref<1x8x128xf32, #tpu.memory_space<vmem>>, vector<1x8x128xf32>
      %29 = vector.shape_cast %28 : vector<1x8x128xf32> to vector<8x128xf32>
      %30 = vector.shape_cast %27 : vector<8x128xf32> to vector<1x8x128xf32>
      tpu.vector_store %arg5[%c0_14, %c0_15, %c0_16], %30 {strides = array<i32>} : memref<1x8x128xf32, #tpu.memory_space<vmem>>, vector<1x8x128xf32>,
      %c0_17 = arith.constant 0 : index
      %c0_18 = arith.constant 0 : index
      %c0_19 = arith.constant 0 : index
      %31 = vector.load %arg6[%c0_17, %c0_18, %c0_19] : memref<1x8x128xf32, #tpu.memory_space<vmem>>, vector<1x8x128xf32>
      %32 = vector.shape_cast %31 : vector<1x8x128xf32> to vector<8x128xf32>
      %33 = vector.shape_cast %17 : vector<8x128xf32> to vector<1x8x128xf32>
      %cst_20 = arith.constant dense<0.000000e+00> : vector<8x128xf32>
      %34 = vector.multi_reduction <add>, %33, %cst_20 [0] : vector<1x8x128xf32> to vector<8x128xf32>
      %35 = arith.addf %32, %34 : vector<8x128xf32>
      %c0_21 = arith.constant 0 : index
      %c0_22 = arith.constant 0 : index
      %c0_23 = arith.constant 0 : index
      %36 = vector.load %arg6[%c0_21, %c0_22, %c0_23] : memref<1x8x128xf32, #tpu.memory_space<vmem>>, vector<1x8x128xf32>
      %37 = vector.shape_cast %36 : vector<1x8x128xf32> to vector<8x128xf32>
      %38 = vector.shape_cast %35 : vector<8x128xf32> to vector<1x8x128xf32>
      tpu.vector_store %arg6[%c0_21, %c0_22, %c0_23], %38 {strides = array<i32>} : memref<1x8x128xf32, #tpu.memory_space<vmem>>, vector<1x8x128xf32>,
      %c0_24 = arith.constant 0 : index
      %c0_25 = arith.constant 0 : index
      %c0_26 = arith.constant 0 : index
      %39 = vector.load %arg7[%c0_24, %c0_25, %c0_26] : memref<1x8x128xf32, #tpu.memory_space<vmem>>, vector<1x8x128xf32>
      %40 = vector.shape_cast %39 : vector<1x8x128xf32> to vector<8x128xf32>
      %41 = vector.shape_cast %18 : vector<8x128xf32> to vector<1x8x128xf32>
      %cst_27 = arith.constant dense<0.000000e+00> : vector<8x128xf32>
      %42 = vector.multi_reduction <add>, %41, %cst_27 [0] : vector<1x8x128xf32> to vector<8x128xf32>
      %43 = arith.addf %40, %42 : vector<8x128xf32>
      %c0_28 = arith.constant 0 : index
      %c0_29 = arith.constant 0 : index
      %c0_30 = arith.constant 0 : index
      %44 = vector.load %arg7[%c0_28, %c0_29, %c0_30] : memref<1x8x128xf32, #tpu.memory_space<vmem>>, vector<1x8x128xf32>
      %45 = vector.shape_cast %44 : vector<1x8x128xf32> to vector<8x128xf32>
      %46 = vector.shape_cast %43 : vector<8x128xf32> to vector<1x8x128xf32>
      tpu.vector_store %arg7[%c0_28, %c0_29, %c0_30], %46 {strides = array<i32>} : memref<1x8x128xf32, #tpu.memory_space<vmem>>, vector<1x8x128xf32>,
    } else {
    }
    %c1_i32_5 = arith.constant 1 : i32
    %11 = arith.cmpi slt, %1, %c1_i32_5 : i32
    %12 = arith.extui %11 : i1 to i32
    %c0_i32_6 = arith.constant 0 : i32
    %13 = arith.cmpi ne, %12, %c0_i32_6 : i32
    scf.if %13 {
      %c0 = arith.constant 0 : index
      %c0_9 = arith.constant 0 : index
      %17 = vector.load %arg3[%c0, %c0_9] : memref<32x128xf32, #tpu.memory_space<vmem>>, vector<32x128xf32>
      %cst = arith.constant 0.000000e+00 : f32
      %18 = vector.broadcast %cst : f32 to vector<32x128xf32>
      %19 = arith.maximumf %17, %18 : vector<32x128xf32>
      %20 = math.absf %17 : vector<32x128xf32>
      %cst_10 = arith.constant 0.000000e+00 : f32
      %21 = vector.broadcast %cst_10 : f32 to vector<32x128xf32>
      %22 = arith.subf %21, %20 : vector<32x128xf32>
      %23 = math.exp %22 : vector<32x128xf32>
      %24 = math.log1p %23 : vector<32x128xf32>
      %25 = arith.addf %19, %24 : vector<32x128xf32>
      %c0_11 = arith.constant 0 : index
      %c0_12 = arith.constant 0 : index
      %c0_13 = arith.constant 0 : index
      %26 = vector.load %arg8[%c0_11, %c0_12, %c0_13] : memref<1x8x128xf32, #tpu.memory_space<vmem>>, vector<1x8x128xf32>
      %27 = vector.shape_cast %26 : vector<1x8x128xf32> to vector<8x128xf32>
      %28 = vector.shape_cast %25 : vector<32x128xf32> to vector<4x8x128xf32>
      %cst_14 = arith.constant dense<0.000000e+00> : vector<8x128xf32>
      %29 = vector.multi_reduction <add>, %28, %cst_14 [0] : vector<4x8x128xf32> to vector<8x128xf32>
      %30 = arith.addf %27, %29 : vector<8x128xf32>
      %c0_15 = arith.constant 0 : index
      %c0_16 = arith.constant 0 : index
      %c0_17 = arith.constant 0 : index
      %31 = vector.load %arg8[%c0_15, %c0_16, %c0_17] : memref<1x8x128xf32, #tpu.memory_space<vmem>>, vector<1x8x128xf32>
      %32 = vector.shape_cast %31 : vector<1x8x128xf32> to vector<8x128xf32>
      %33 = vector.shape_cast %30 : vector<8x128xf32> to vector<1x8x128xf32>
      tpu.vector_store %arg8[%c0_15, %c0_16, %c0_17], %33 {strides = array<i32>} : memref<1x8x128xf32, #tpu.memory_space<vmem>>, vector<1x8x128xf32>,
    } else {
    }
    %c1_i32_7 = arith.constant 1 : i32
    %14 = arith.cmpi slt, %1, %c1_i32_7 : i32
    %15 = arith.extui %14 : i1 to i32
    %c0_i32_8 = arith.constant 0 : i32
    %16 = arith.cmpi ne, %15, %c0_i32_8 : i32
    scf.if %16 {
      %c0 = arith.constant 0 : index
      %c0_9 = arith.constant 0 : index
      %17 = vector.load %arg4[%c0, %c0_9] : memref<8x128xf32, #tpu.memory_space<vmem>>, vector<8x128xf32>
      %c0_10 = arith.constant 0 : index
      %c0_11 = arith.constant 0 : index
      %c0_12 = arith.constant 0 : index
      %18 = vector.load %arg9[%c0_10, %c0_11, %c0_12] : memref<1x8x128xf32, #tpu.memory_space<vmem>>, vector<1x8x128xf32>
      %19 = vector.shape_cast %18 : vector<1x8x128xf32> to vector<8x128xf32>
      %20 = vector.shape_cast %17 : vector<8x128xf32> to vector<1x8x128xf32>
      %cst = arith.constant dense<0.000000e+00> : vector<8x128xf32>
      %21 = vector.multi_reduction <add>, %20, %cst [0] : vector<1x8x128xf32> to vector<8x128xf32>
      %22 = arith.addf %19, %21 : vector<8x128xf32>
      %c0_13 = arith.constant 0 : index
      %c0_14 = arith.constant 0 : index
      %c0_15 = arith.constant 0 : index
      %23 = vector.load %arg9[%c0_13, %c0_14, %c0_15] : memref<1x8x128xf32, #tpu.memory_space<vmem>>, vector<1x8x128xf32>
      %24 = vector.shape_cast %23 : vector<1x8x128xf32> to vector<8x128xf32>
      %25 = vector.shape_cast %22 : vector<8x128xf32> to vector<1x8x128xf32>
      tpu.vector_store %arg9[%c0_13, %c0_14, %c0_15], %25 {strides = array<i32>} : memref<1x8x128xf32, #tpu.memory_space<vmem>>, vector<1x8x128xf32>,
    } else {
    }
    return
  }
  func.func @transform_0(%arg0: i32, %arg1: i32) -> (i32, i32) {
    %c1_i32 = arith.constant 1 : i32
    %0 = arith.muli %arg0, %c1_i32 : i32
    %1 = arith.addi %0, %arg1 : i32
    %c0_i32 = arith.constant 0 : i32
    %c0_i32_0 = arith.constant 0 : i32
    return %1, %c0_i32 : i32, i32
  }
  func.func @transform_1(%arg0: i32, %arg1: i32) -> (i32, i32) {
    %c1_i32 = arith.constant 1 : i32
    %0 = arith.muli %arg0, %c1_i32 : i32
    %1 = arith.addi %0, %arg1 : i32
    %c0_i32 = arith.constant 0 : i32
    %2 = arith.minsi %1, %c0_i32 : i32
    %c0_i32_0 = arith.constant 0 : i32
    %c0_i32_1 = arith.constant 0 : i32
    return %2, %c0_i32_0 : i32, i32
  }
  func.func @transform_2(%arg0: i32, %arg1: i32) -> (i32, i32) {
    %c1_i32 = arith.constant 1 : i32
    %0 = arith.muli %arg0, %c1_i32 : i32
    %1 = arith.addi %0, %arg1 : i32
    %c0_i32 = arith.constant 0 : i32
    %2 = arith.minsi %1, %c0_i32 : i32
    %c0_i32_0 = arith.constant 0 : i32
    %c0_i32_1 = arith.constant 0 : i32
    return %2, %c0_i32_0 : i32, i32
  }
  func.func @transform_3(%arg0: i32, %arg1: i32) -> (i32, i32, i32) {
    %c0_i32 = arith.constant 0 : i32
    %c0_i32_0 = arith.constant 0 : i32
    %c0_i32_1 = arith.constant 0 : i32
    return %arg0, %c0_i32, %c0_i32_0 : i32, i32, i32
  }
  func.func @transform_4(%arg0: i32, %arg1: i32) -> (i32, i32, i32) {
    %c0_i32 = arith.constant 0 : i32
    %c0_i32_0 = arith.constant 0 : i32
    %c0_i32_1 = arith.constant 0 : i32
    return %arg0, %c0_i32, %c0_i32_0 : i32, i32, i32
  }
  func.func @transform_5(%arg0: i32, %arg1: i32) -> (i32, i32, i32) {
    %c0_i32 = arith.constant 0 : i32
    %c0_i32_0 = arith.constant 0 : i32
    %c0_i32_1 = arith.constant 0 : i32
    return %arg0, %c0_i32, %c0_i32_0 : i32, i32, i32
  }
  func.func @transform_6(%arg0: i32, %arg1: i32) -> (i32, i32, i32) {
    %c0_i32 = arith.constant 0 : i32
    %c0_i32_0 = arith.constant 0 : i32
    %c0_i32_1 = arith.constant 0 : i32
    return %arg0, %c0_i32, %c0_i32_0 : i32, i32, i32
  }
  func.func @transform_7(%arg0: i32, %arg1: i32) -> (i32, i32, i32) {
    %c0_i32 = arith.constant 0 : i32
    %c0_i32_0 = arith.constant 0 : i32
    %c0_i32_1 = arith.constant 0 : i32
    return %arg0, %c0_i32, %c0_i32_0 : i32, i32, i32
  }
}

</mosaic_0001>

<llo_original>
// kernel: cu_loss.1
$region0: #{cu_loss.1}
  #allocation0 [shape = 'u32[]', space=smem, size = 0x4, offset = 0x4, fixed_abs, tag = 'smem constant byte address 0x4 - core index']
  #allocation1 [shape = 'u32[144,128]{1,0:T(1,128)}', space=vmem, size = 0x12000, scoped, tag = 'internal scratch']
  %s0 = inlined_call_operand.vmem [shape: f32[9,128], index: 0, kind: input, shape index: {}]
  %s1 = inlined_call_operand.hbm [shape: f32[32,128], index: 1, kind: input, shape index: {}]
  %s2 = inlined_call_operand.vmem [shape: f32[8,128], index: 2, kind: input, shape index: {}]
  %s3 = inlined_call_operand.vmem [shape: f32[2,8,128], index: 3, kind: output, shape index: {0}]
  %s4 = inlined_call_operand.vmem [shape: f32[2,8,128], index: 4, kind: output, shape index: {1}]
  %s5 = inlined_call_operand.vmem [shape: f32[2,8,128], index: 5, kind: output, shape index: {2}]
  %s6 = inlined_call_operand.vmem [shape: f32[2,8,128], index: 6, kind: output, shape index: {3}]
  %s7 = inlined_call_operand.vmem [shape: f32[2,8,128], index: 7, kind: output, shape index: {4}]
  %8 = xla_tuple %s3, %s4, %s5, %s6, %s7
  %s9 = sld [smem:[#allocation0]]
  $region93: #{cu_loss.1} parent=0
    _
  %s11 = ssub.s32 1, %s9
  %s12 = scalar_select 0, %s11, %s9
  $region1: #{cu_loss.1} parent=0
    #allocation2 [shape = 'u8[32768]{0}', space=vmem, size = 0x8000, scoped, tag = 'input window, operand 1']
    #allocation3 [shape = 's32[2]{0}', space=sflag, size = 0x8, scoped, tag = 'scoped memory for cu_loss.1']
    %13 = vsyncpa [#allocation3], 0
    %s14 = scalar_lea.sflag [#allocation3], 1
    %15 = vsyncpa %s14, 0
    loop: start=0, step=1, limit=4
    $region2: #{cu_loss.1} parent=1 // loop_pre_header
      _
    $region3: #{cu_loss.1} parent=1 // loop_header
      %s17 = sphi 0, %s21
      %p18 = scmp.ge.s32.totalorder %s17, 4
      %s24 = sphi 0, %s36
      %s25 = sphi 0, %s32
      %s26 = sphi 0, %s24
      %s27 = sphi 0, %s25
      %s28 = sphi 0, %s26
      %s29 = sphi 0, %s27
      %s41 = sphi 0, %s43
      %s44 = sphi 0, %s41
      %s45 = sphi 0, %s44
      %s61 = sphi 0, %s45
      %s73 = sphi 0, %s75
      %s76 = sphi 0, %s73
      %s77 = sphi 0, %s76
      %s93 = sphi 0, %s77
      %s105 = sphi 0, %s107
      %s108 = sphi 0, %s105
      %s109 = sphi 0, %s108
      %s125 = sphi 0, %s109
      %s131 = sphi 0, %s133
      %s134 = sphi 0, %s131
      %s135 = sphi 0, %s134
      %s151 = sphi 0, %s135
      %s157 = sphi 0, %s159
      %s160 = sphi 0, %s157
      %s161 = sphi 0, %s160
      %s177 = sphi 0, %s161
      %s183 = sphi 0, %s185
      %s186 = sphi 0, %s183
      %s187 = sphi 0, %s186
      %s203 = sphi 0, %s187
      %s209 = sphi 0, %s211
      %s212 = sphi 0, %s209
      %s213 = sphi 0, %s212
      %s229 = sphi 0, %s213
      %s235 = sphi 0, %s237
      %s238 = sphi 0, %s235
      %s239 = sphi 0, %s238
      %s255 = sphi 0, %s239
    $region4: #{cu_loss.1} parent=1 // loop_header_branch
      %20 = sbr.rel (%p18) target = $region8
    $region5: #{cu_loss.1} parent=1 // loop_body
      %s22 = ssub.s32 %s17, 1
      %s23 = ssub.s32 %s17, 2
      %s30 = sadd.s32 1, %s25
      %p31 = scmp.ge.s32.totalorder %s30, 1
      %s32 = scalar_select %p31, 0, %s30
      %s33 = sadd.s32 1, %s24
      %s34 = scalar_select %p31, %s33, %s24
      %p35 = scmp.ge.s32.totalorder %s34, 2
      %s36 = scalar_select %p35, 0, %s34
      %s37 = sadd.s32 %s24, %s25
      %s38 = sadd.s32 %s36, %s32
      %s39 = ssub.s32 %s37, %s38
      %p40 = scmp.eq.s32.totalorder %s39, 0
      %s42 = sadd.s32 %s41, 1
      %s43 = scalar_select %p40, %s41, %s42
      %p46 = pneg %p40
      %p47 = scmp.eq.s32.totalorder %s17, 1
      %p48 = por %p46, %p47
      %p49 = scmp.ne.s32.totalorder %s41, %s44
      %p50 = scmp.eq.s32.totalorder %s17, 0
      %p51 = por %p49, %p50
      %p52 = scmp.ne.s32.totalorder %s41, %s44
      %p53 = scmp.eq.s32.totalorder %s22, 1
      %p54 = por %p52, %p53
      %p55 = scmp.ne.s32.totalorder %s44, %s45
      %p56 = scmp.eq.s32.totalorder %s22, 0
      %p57 = por %p55, %p56
      %p58 = scmp.ne.s32.totalorder %s44, %s45
      %p59 = scmp.eq.s32.totalorder %s23, 1
      %p60 = por %p58, %p59
      %p62 = scmp.ne.s32.totalorder %s45, %s61
      %p63 = scmp.eq.s32.totalorder %s23, 0
      %p64 = por %p62, %p63
      %s65 = sadd.s32 %s24, %s25
      %p66 = scmp.lt.s32.totalorder %s65, 0
      %s67 = scalar_select %p66, %s65, 0
      %s68 = sadd.s32 %s36, %s32
      %p69 = scmp.lt.s32.totalorder %s68, 0
      %s70 = scalar_select %p69, %s68, 0
      %s71 = ssub.s32 %s67, %s70
      %p72 = scmp.eq.s32.totalorder %s71, 0
      %s74 = sadd.s32 %s73, 1
      %s75 = scalar_select %p72, %s73, %s74
      %p78 = pneg %p72
      %p79 = scmp.eq.s32.totalorder %s17, 1
      %p80 = por %p78, %p79
      %p81 = scmp.ne.s32.totalorder %s73, %s76
      %p82 = scmp.eq.s32.totalorder %s17, 0
      %p83 = por %p81, %p82
      %p84 = scmp.ne.s32.totalorder %s73, %s76
      %p85 = scmp.eq.s32.totalorder %s22, 1
      %p86 = por %p84, %p85
      %p87 = scmp.ne.s32.totalorder %s76, %s77
      %p88 = scmp.eq.s32.totalorder %s22, 0
      %p89 = por %p87, %p88
      %p90 = scmp.ne.s32.totalorder %s76, %s77
      %p91 = scmp.eq.s32.totalorder %s23, 1
      %p92 = por %p90, %p91
      %p94 = scmp.ne.s32.totalorder %s77, %s93
      %p95 = scmp.eq.s32.totalorder %s23, 0
      %p96 = por %p94, %p95
      %s97 = sadd.s32 %s24, %s25
      %p98 = scmp.lt.s32.totalorder %s97, 0
      %s99 = scalar_select %p98, %s97, 0
      %s100 = sadd.s32 %s36, %s32
      %p101 = scmp.lt.s32.totalorder %s100, 0
      %s102 = scalar_select %p101, %s100, 0
      %s103 = ssub.s32 %s99, %s102
      %p104 = scmp.eq.s32.totalorder %s103, 0
      %s106 = sadd.s32 %s105, 1
      %s107 = scalar_select %p104, %s105, %s106
      %p110 = pneg %p104
      %p111 = scmp.eq.s32.totalorder %s17, 1
      %p112 = por %p110, %p111
      %p113 = scmp.ne.s32.totalorder %s105, %s108
      %p114 = scmp.eq.s32.totalorder %s17, 0
      %p115 = por %p113, %p114
      %p116 = scmp.ne.s32.totalorder %s105, %s108
      %p117 = scmp.eq.s32.totalorder %s22, 1
      %p118 = por %p116, %p117
      %p119 = scmp.ne.s32.totalorder %s108, %s109
      %p120 = scmp.eq.s32.totalorder %s22, 0
      %p121 = por %p119, %p120
      %p122 = scmp.ne.s32.totalorder %s108, %s109
      %p123 = scmp.eq.s32.totalorder %s23, 1
      %p124 = por %p122, %p123
      %p126 = scmp.ne.s32.totalorder %s109, %s125
      %p127 = scmp.eq.s32.totalorder %s23, 0
      %p128 = por %p126, %p127
      %s129 = ssub.s32 %s24, %s36
      %p130 = scmp.eq.s32.totalorder %s129, 0
      %s132 = sadd.s32 %s131, 1
      %s133 = scalar_select %p130, %s131, %s132
      %p136 = pneg %p130
      %p137 = scmp.eq.s32.totalorder %s17, 1
      %p138 = por %p136, %p137
      %p139 = scmp.ne.s32.totalorder %s131, %s134
      %p140 = scmp.eq.s32.totalorder %s17, 0
      %p141 = por %p139, %p140
      %p142 = scmp.ne.s32.totalorder %s131, %s134
      %p143 = scmp.eq.s32.totalorder %s22, 1
      %p144 = por %p142, %p143
      %p145 = scmp.ne.s32.totalorder %s134, %s135
      %p146 = scmp.eq.s32.totalorder %s22, 0
      %p147 = por %p145, %p146
      %p148 = scmp.ne.s32.totalorder %s134, %s135
      %p149 = scmp.eq.s32.totalorder %s23, 1
      %p150 = por %p148, %p149
      %p152 = scmp.ne.s32.totalorder %s135, %s151
      %p153 = scmp.eq.s32.totalorder %s23, 0
      %p154 = por %p152, %p153
      %s155 = ssub.s32 %s24, %s36
      %p156 = scmp.eq.s32.totalorder %s155, 0
      %s158 = sadd.s32 %s157, 1
      %s159 = scalar_select %p156, %s157, %s158
      %p162 = pneg %p156
      %p163 = scmp.eq.s32.totalorder %s17, 1
      %p164 = por %p162, %p163
      %p165 = scmp.ne.s32.totalorder %s157, %s160
      %p166 = scmp.eq.s32.totalorder %s17, 0
      %p167 = por %p165, %p166
      %p168 = scmp.ne.s32.totalorder %s157, %s160
      %p169 = scmp.eq.s32.totalorder %s22, 1
      %p170 = por %p168, %p169
      %p171 = scmp.ne.s32.totalorder %s160, %s161
      %p172 = scmp.eq.s32.totalorder %s22, 0
      %p173 = por %p171, %p172
      %p174 = scmp.ne.s32.totalorder %s160, %s161
      %p175 = scmp.eq.s32.totalorder %s23, 1
      %p176 = por %p174, %p175
      %p178 = scmp.ne.s32.totalorder %s161, %s177
      %p179 = scmp.eq.s32.totalorder %s23, 0
      %p180 = por %p178, %p179
      %s181 = ssub.s32 %s24, %s36
      %p182 = scmp.eq.s32.totalorder %s181, 0
      %s184 = sadd.s32 %s183, 1
      %s185 = scalar_select %p182, %s183, %s184
      %p188 = pneg %p182
      %p189 = scmp.eq.s32.totalorder %s17, 1
      %p190 = por %p188, %p189
      %p191 = scmp.ne.s32.totalorder %s183, %s186
      %p192 = scmp.eq.s32.totalorder %s17, 0
      %p193 = por %p191, %p192
      %p194 = scmp.ne.s32.totalorder %s183, %s186
      %p195 = scmp.eq.s32.totalorder %s22, 1
      %p196 = por %p194, %p195
      %p197 = scmp.ne.s32.totalorder %s186, %s187
      %p198 = scmp.eq.s32.totalorder %s22, 0
      %p199 = por %p197, %p198
      %p200 = scmp.ne.s32.totalorder %s186, %s187
      %p201 = scmp.eq.s32.totalorder %s23, 1
      %p202 = por %p200, %p201
      %p204 = scmp.ne.s32.totalorder %s187, %s203
      %p205 = scmp.eq.s32.totalorder %s23, 0
      %p206 = por %p204, %p205
      %s207 = ssub.s32 %s24, %s36
      %p208 = scmp.eq.s32.totalorder %s207, 0
      %s210 = sadd.s32 %s209, 1
      %s211 = scalar_select %p208, %s209, %s210
      %p214 = pneg %p208
      %p215 = scmp.eq.s32.totalorder %s17, 1
      %p216 = por %p214, %p215
      %p217 = scmp.ne.s32.totalorder %s209, %s212
      %p218 = scmp.eq.s32.totalorder %s17, 0
      %p219 = por %p217, %p218
      %p220 = scmp.ne.s32.totalorder %s209, %s212
      %p221 = scmp.eq.s32.totalorder %s22, 1
      %p222 = por %p220, %p221
      %p223 = scmp.ne.s32.totalorder %s212, %s213
      %p224 = scmp.eq.s32.totalorder %s22, 0
      %p225 = por %p223, %p224
      %p226 = scmp.ne.s32.totalorder %s212, %s213
      %p227 = scmp.eq.s32.totalorder %s23, 1
      %p228 = por %p226, %p227
      %p230 = scmp.ne.s32.totalorder %s213, %s229
      %p231 = scmp.eq.s32.totalorder %s23, 0
      %p232 = por %p230, %p231
      %s233 = ssub.s32 %s24, %s36
      %p234 = scmp.eq.s32.totalorder %s233, 0
      %s236 = sadd.s32 %s235, 1
      %s237 = scalar_select %p234, %s235, %s236
      %p240 = pneg %p234
      %p241 = scmp.eq.s32.totalorder %s17, 1
      %p242 = por %p240, %p241
      %p243 = scmp.ne.s32.totalorder %s235, %s238
      %p244 = scmp.eq.s32.totalorder %s17, 0
      %p245 = por %p243, %p244
      %p246 = scmp.ne.s32.totalorder %s235, %s238
      %p247 = scmp.eq.s32.totalorder %s22, 1
      %p248 = por %p246, %p247
      %p249 = scmp.ne.s32.totalorder %s238, %s239
      %p250 = scmp.eq.s32.totalorder %s22, 0
      %p251 = por %p249, %p250
      %p252 = scmp.ne.s32.totalorder %s238, %s239
      %p253 = scmp.eq.s32.totalorder %s23, 1
      %p254 = por %p252, %p253
      %p256 = scmp.ne.s32.totalorder %s239, %s255
      %p257 = scmp.eq.s32.totalorder %s23, 0
      %p258 = por %p256, %p257
      %p259 = scmp.le.s32.totalorder 1, %s17
      %p260 = scmp.lt.s32.totalorder %s17, 3
      %p261 = pnand %p259, %p260
      %p262 = pneg %p261
      // Predicated region
      $region9: #{cu_loss.1} parent=5 // pred_check
        _
      $region10: #{cu_loss.1} parent=5 // pred_check_branch
        %264 = sbr.rel (%p261) target = $region12
      $region11: #{cu_loss.1} parent=5 // pred_region
        %s265 = ssub.s32 %s17, 1
      $region12: #{cu_loss.1} parent=5 // pred_fallthru
        _
      %p266 = scmp.lt.s32.totalorder %s17, 2
      // Predicated region
      $region13: #{cu_loss.1} parent=5 // pred_check
        %p267 = pneg %p266
      $region14: #{cu_loss.1} parent=5 // pred_check_branch
        %269 = sbr.rel (%p267) target = $region16
      $region15: #{cu_loss.1} parent=5 // pred_region
        // Predicated region
        $region17: #{cu_loss.1} parent=15 // pred_check
          %p270 = pneg %p51
        $region18: #{cu_loss.1} parent=15 // pred_check_branch
          %272 = sbr.rel (%p270) target = $region20
        $region19: #{cu_loss.1} parent=15 // pred_region
          %s273 = sadd.s32 %s24, %s25
          %p274 = scmp.lt.s32.totalorder %s273, 1
          %s275 = scalar_select %p274, %s273, 1
          %s276 = smul.addr %s275, 8
          %s277 = scalar_lea.vmem %s0, %s276
          %s278 = sadd.s32 %s24, %s25
        $region20: #{cu_loss.1} parent=15 // pred_fallthru
          _
        // Predicated region
        $region21: #{cu_loss.1} parent=15 // pred_check
          %p279 = pneg %p83
        $region22: #{cu_loss.1} parent=15 // pred_check_branch
          %281 = sbr.rel (%p279) target = $region24
        $region23: #{cu_loss.1} parent=15 // pred_region
          %s282 = sand.u32 %s73, 1
          %s283 = scalar_lea.sflag [#allocation3], %s282
          %s284 = sand.u32 %s73, 1
          %s285 = smul.addr %s284, 32
          %s286 = scalar_lea.vmem [#allocation2], %s285
          %s287 = sadd.s32 %s24, %s25
          %p288 = scmp.lt.s32.totalorder %s287, 0
          %s289 = scalar_select %p288, %s287, 0
          %s290 = smul.u32 4, %s289
          %s292 = ssub.s32 512, 512
          %293 = vsyncadd %s283, %s292
          %s294 = smul.addr %s290, 128
          %s295 = scalar_lea.hbm %s1, %s294
          %s296 = sshll.u32 %s286, 4
          %s297 = int_to_ptr.vmem [resolvable:$true] %s296
          %302 = dma.hbm_to_vmem [thread:$0]  %s295, 512, %s297, %s283, 128, 128, 8
        $region24: #{cu_loss.1} parent=15 // pred_fallthru
          _
        // Predicated region
        $region25: #{cu_loss.1} parent=15 // pred_check
          %p303 = pneg %p115
        $region26: #{cu_loss.1} parent=15 // pred_check_branch
          %305 = sbr.rel (%p303) target = $region28
        $region27: #{cu_loss.1} parent=15 // pred_region
          %s306 = sadd.s32 %s24, %s25
          %p307 = scmp.lt.s32.totalorder %s306, 0
          %s308 = scalar_select %p307, %s306, 0
          %p309 = scmp.lt.s32.totalorder %s308, 0
          %s310 = scalar_select %p309, %s308, 0
          %s311 = smul.addr %s310, 8
          %s312 = scalar_lea.vmem %s2, %s311
          %s313 = sadd.s32 %s24, %s25
          %p314 = scmp.lt.s32.totalorder %s313, 0
          %s315 = scalar_select %p314, %s313, 0
        $region28: #{cu_loss.1} parent=15 // pred_fallthru
          _
      $region16: #{cu_loss.1} parent=5 // pred_fallthru
        _
      %p316 = scmp.le.s32.totalorder 1, %s17
      %p317 = scmp.lt.s32.totalorder %s17, 3
      %p318 = pnand %p316, %p317
      %p319 = pneg %p318
      // Predicated region
      $region29: #{cu_loss.1} parent=5 // pred_check
        _
      $region30: #{cu_loss.1} parent=5 // pred_check_branch
        %321 = sbr.rel (%p318) target = $region32
      $region31: #{cu_loss.1} parent=5 // pred_region
        %s322 = ssub.s32 %s17, 1
        %s323 = sand.u32 %s76, 1
        %s324 = scalar_lea.sflag [#allocation3], %s323
        %s325 = sand.u32 %s76, 1
        %s326 = smul.addr %s325, 32
        %s327 = scalar_lea.vmem [#allocation2], %s326
        // Predicated region
        $region33: #{cu_loss.1} parent=31 // pred_check
          %p328 = pneg %p89
        $region34: #{cu_loss.1} parent=31 // pred_check_branch
          %330 = sbr.rel (%p328) target = $region36
        $region35: #{cu_loss.1} parent=31 // pred_region
          %331 = dma.done %s324, 512
        $region36: #{cu_loss.1} parent=31 // pred_fallthru
          _
        %s332 = sadd.s32 %s26, %s27
        %p333 = scmp.lt.s32.totalorder %s332, 1
        %s334 = scalar_select %p333, %s332, 1
        %s335 = smul.addr %s334, 8
        %s336 = scalar_lea.vmem %s0, %s335
        %p337 = pneg %p57
        %p338 = pneg %p54
        %s339 = sand.u32 %s76, 1
        %s340 = scalar_lea.sflag [#allocation3], %s339
        %s341 = sand.u32 %s76, 1
        %s342 = smul.addr %s341, 32
        %s343 = scalar_lea.vmem [#allocation2], %s342
        %p344 = pneg %p89
        %p345 = pneg %p86
        %s346 = sadd.s32 %s26, %s27
        %p347 = scmp.lt.s32.totalorder %s346, 0
        %s348 = scalar_select %p347, %s346, 0
        %p349 = scmp.lt.s32.totalorder %s348, 0
        %s350 = scalar_select %p349, %s348, 0
        %s351 = smul.addr %s350, 8
        %s352 = scalar_lea.vmem %s2, %s351
        %p353 = pneg %p121
        %p354 = pneg %p118
        %p355 = pneg %p147
        %p356 = pneg %p144
        %p357 = scmp.lt.s32.totalorder %s26, 1
        %s358 = scalar_select %p357, %s26, 1
        %s359 = smul.addr %s358, 8
        %s360 = scalar_lea.vmem %s3, %s359
        %p361 = pneg %p173
        %p362 = pneg %p170
        %p363 = scmp.lt.s32.totalorder %s26, 1
        %s364 = scalar_select %p363, %s26, 1
        %s365 = smul.addr %s364, 8
        %s366 = scalar_lea.vmem %s4, %s365
        %p367 = pneg %p199
        %p368 = pneg %p196
        %p369 = scmp.lt.s32.totalorder %s26, 1
        %s370 = scalar_select %p369, %s26, 1
        %s371 = smul.addr %s370, 8
        %s372 = scalar_lea.vmem %s5, %s371
        %p373 = pneg %p225
        %p374 = pneg %p222
        %p375 = scmp.lt.s32.totalorder %s26, 1
        %s376 = scalar_select %p375, %s26, 1
        %s377 = smul.addr %s376, 8
        %s378 = scalar_lea.vmem %s6, %s377
        %p379 = pneg %p251
        %p380 = pneg %p248
        %p381 = scmp.lt.s32.totalorder %s26, 1
        %s382 = scalar_select %p381, %s26, 1
        %s383 = smul.addr %s382, 8
        %s384 = scalar_lea.vmem %s7, %s383
        %s385 = sadd.s32 %s26, %s27
        %p386 = scmp.lt.s32.totalorder %s385, 1
        %s387 = scalar_select %p386, %s385, 1
        %s388 = smul.addr %s387, 8
        %s389 = scalar_lea.vmem %s0, %s388
        %s390 = sadd.s32 %s26, %s27
        %s391 = sadd.s32 %s26, %s27
        %p392 = scmp.lt.s32.totalorder %s391, 0
        %s393 = scalar_select %p392, %s391, 0
        %s394 = smul.u32 4, %s393
        %s395 = sadd.s32 %s26, %s27
        %p396 = scmp.lt.s32.totalorder %s395, 0
        %s397 = scalar_select %p396, %s395, 0
        %p398 = scmp.lt.s32.totalorder %s397, 0
        %s399 = scalar_select %p398, %s397, 0
        %s400 = smul.addr %s399, 8
        %s401 = scalar_lea.vmem %s2, %s400
        %s402 = sadd.s32 %s26, %s27
        %p403 = scmp.lt.s32.totalorder %s402, 0
        %s404 = scalar_select %p403, %s402, 0
        %p405 = scmp.lt.s32.totalorder %s26, 1
        %s406 = scalar_select %p405, %s26, 1
        %s407 = smul.addr %s406, 8
        %s408 = scalar_lea.vmem %s3, %s407
        %p409 = scmp.lt.s32.totalorder %s26, 1
        %s410 = scalar_select %p409, %s26, 1
        %s411 = smul.addr %s410, 8
        %s412 = scalar_lea.vmem %s4, %s411
        %p413 = scmp.lt.s32.totalorder %s26, 1
        %s414 = scalar_select %p413, %s26, 1
        %s415 = smul.addr %s414, 8
        %s416 = scalar_lea.vmem %s5, %s415
        %p417 = scmp.lt.s32.totalorder %s26, 1
        %s418 = scalar_select %p417, %s26, 1
        %s419 = smul.addr %s418, 8
        %s420 = scalar_lea.vmem %s6, %s419
        %p421 = scmp.lt.s32.totalorder %s26, 1
        %s422 = scalar_select %p421, %s26, 1
        %s423 = smul.addr %s422, 8
        %s424 = scalar_lea.vmem %s7, %s423
        %s425 = sadd.s32 %s26, %s27
        %p426 = scmp.eq.s32.totalorder %s27, 0
        // Predicated region
        $region37: #{cu_loss.1} parent=31 // pred_check
          %p427 = pneg %p426
        $region38: #{cu_loss.1} parent=31 // pred_check_branch
          %429 = sbr.rel (%p427) target = $region40
        $region39: #{cu_loss.1} parent=31 // pred_region
          %430 = vst [vmem:[%s408] sm:$0xff] 0.0
          %431 = vst [vmem:[%s412] sm:$0xff] 0.0
          %432 = vst [vmem:[%s416] sm:$0xff] 0.0
          %433 = vst [vmem:[%s420] sm:$0xff] 0.0
          %434 = vst [vmem:[%s424] sm:$0xff] 0.0
        $region40: #{cu_loss.1} parent=31 // pred_fallthru
          _
        %p435 = scmp.eq.s32.totalorder %s425, 1
        // Predicated region
        $region41: #{cu_loss.1} parent=31 // pred_check
          %p436 = pneg %p435
        $region42: #{cu_loss.1} parent=31 // pred_check_branch
          %438 = sbr.rel (%p436) target = $region44
        $region43: #{cu_loss.1} parent=31 // pred_region
          %v439 = vld [vmem:[%s389] sm:$0xff]
          %v440 = vlaneseq
          %v441 = vshrl.u32 %v440, 7
          %vm442 = vcmp.lt.s32.totalorder %v441, 1
          %v443 = vsel %vm442, %v439, 0.0
          %v444 = vand.u32 2147483647, %v443
          %v445 = vsub.f32 0.0, %v444
          %v446 = vmul.f32 %v445, 1.442695
          %v447 = vpow.pop %v446
          %v448 = vadd.f32 %v447, 1.0
          %v449 = vlog2.pop %v448
          %v450 = vmul.f32 %v449, 0.6931472
          %v451 = vmul.f32 -0.5, %v447
          %v452 = vadd.f32 %v451, 1.0
          %v453 = vmul.f32 %v452, %v447
          %v454 = vand.u32 2147483647, %v447
          %vm455 = vcmp.lt.f32.partialorder %v454, 0.0004427343
          %v456 = vsel %vm455, %v453, %v450
          %v457 = vld [vmem:[%s408] sm:$0xff]
          %v458 = vadd.f32 %v456, 0.0
          %v459 = vadd.f32 %v457, %v458
          %460 = vst [vmem:[%s408] sm:$0xff] %v459
          %v461 = vld [vmem:[%s412] sm:$0xff]
          %v462 = vadd.f32 %v443, 0.0
          %v463 = vadd.f32 %v461, %v462
          %464 = vst [vmem:[%s412] sm:$0xff] %v463
          %v465 = vld [vmem:[%s416] sm:$0xff]
          %v466 = vadd.f32 %v444, 0.0
          %v467 = vadd.f32 %v465, %v466
          %468 = vst [vmem:[%s416] sm:$0xff] %v467
        $region44: #{cu_loss.1} parent=31 // pred_fallthru
          _
        %p469 = scmp.lt.s32.totalorder %s425, 1
        // Predicated region
        $region45: #{cu_loss.1} parent=31 // pred_check
          %p470 = pneg %p469
        $region46: #{cu_loss.1} parent=31 // pred_check_branch
          %472 = sbr.rel (%p470) target = $region48
        $region47: #{cu_loss.1} parent=31 // pred_region
          %v473 = vld [vmem:[%s389] sm:$0xff]
          %v474 = vand.u32 2147483647, %v473
          %v475 = vsub.f32 0.0, %v474
          %v476 = vmul.f32 %v475, 1.442695
          %v477 = vpow.pop %v476
          %v478 = vadd.f32 %v477, 1.0
          %v479 = vlog2.pop %v478
          %v480 = vmul.f32 %v479, 0.6931472
          %v481 = vmul.f32 -0.5, %v477
          %v482 = vadd.f32 %v481, 1.0
          %v483 = vmul.f32 %v482, %v477
          %v484 = vand.u32 2147483647, %v477
          %vm485 = vcmp.lt.f32.partialorder %v484, 0.0004427343
          %v486 = vsel %vm485, %v483, %v480
          %v487 = vld [vmem:[%s408] sm:$0xff]
          %v488 = vadd.f32 %v486, 0.0
          %v489 = vadd.f32 %v487, %v488
          %490 = vst [vmem:[%s408] sm:$0xff] %v489
          %v491 = vld [vmem:[%s412] sm:$0xff]
          %v492 = vadd.f32 %v473, 0.0
          %v493 = vadd.f32 %v491, %v492
          %494 = vst [vmem:[%s412] sm:$0xff] %v493
          %v495 = vld [vmem:[%s416] sm:$0xff]
          %v496 = vadd.f32 %v474, 0.0
          %v497 = vadd.f32 %v495, %v496
          %498 = vst [vmem:[%s416] sm:$0xff] %v497
          %v499 = vld [vmem:[%s327] sm:$0xff]
          %v500 = vld [vmem:[%s327 + $0x8] sm:$0xff]
          %v501 = vld [vmem:[%s327 + $0x10] sm:$0xff]
          %v502 = vld [vmem:[%s327 + $0x18] sm:$0xff]
          %v503 = vmax.f32 %v499, 0.0
          %v504 = vmax.f32 %v500, 0.0
          %v505 = vmax.f32 %v501, 0.0
          %v506 = vmax.f32 %v502, 0.0
          %v507 = vand.u32 2147483647, %v499
          %v508 = vand.u32 2147483647, %v500
          %v509 = vand.u32 2147483647, %v501
          %v510 = vand.u32 2147483647, %v502
          %v511 = vsub.f32 0.0, %v507
          %v512 = vsub.f32 0.0, %v508
          %v513 = vsub.f32 0.0, %v509
          %v514 = vsub.f32 0.0, %v510
          %v515 = vmul.f32 %v511, 1.442695
          %v516 = vpow.pop %v515
          %v517 = vmul.f32 %v512, 1.442695
          %v518 = vpow.pop %v517
          %v519 = vmul.f32 %v513, 1.442695
          %v520 = vpow.pop %v519
          %v521 = vmul.f32 %v514, 1.442695
          %v522 = vpow.pop %v521
          %v523 = vadd.f32 %v516, 1.0
          %v524 = vlog2.pop %v523
          %v525 = vmul.f32 %v524, 0.6931472
          %v526 = vmul.f32 -0.5, %v516
          %v527 = vadd.f32 %v526, 1.0
          %v528 = vmul.f32 %v527, %v516
          %v529 = vand.u32 2147483647, %v516
          %vm530 = vcmp.lt.f32.partialorder %v529, 0.0004427343
          %v531 = vsel %vm530, %v528, %v525
          %v532 = vadd.f32 %v518, 1.0
          %v533 = vlog2.pop %v532
          %v534 = vmul.f32 %v533, 0.6931472
          %v535 = vmul.f32 -0.5, %v518
          %v536 = vadd.f32 %v535, 1.0
          %v537 = vmul.f32 %v536, %v518
          %v538 = vand.u32 2147483647, %v518
          %vm539 = vcmp.lt.f32.partialorder %v538, 0.0004427343
          %v540 = vsel %vm539, %v537, %v534
          %v541 = vadd.f32 %v520, 1.0
          %v542 = vlog2.pop %v541
          %v543 = vmul.f32 %v542, 0.6931472
          %v544 = vmul.f32 -0.5, %v520
          %v545 = vadd.f32 %v544, 1.0
          %v546 = vmul.f32 %v545, %v520
          %v547 = vand.u32 2147483647, %v520
          %vm548 = vcmp.lt.f32.partialorder %v547, 0.0004427343
          %v549 = vsel %vm548, %v546, %v543
          %v550 = vadd.f32 %v522, 1.0
          %v551 = vlog2.pop %v550
          %v552 = vmul.f32 %v551, 0.6931472
          %v553 = vmul.f32 -0.5, %v522
          %v554 = vadd.f32 %v553, 1.0
          %v555 = vmul.f32 %v554, %v522
          %v556 = vand.u32 2147483647, %v522
          %vm557 = vcmp.lt.f32.partialorder %v556, 0.0004427343
          %v558 = vsel %vm557, %v555, %v552
          %v559 = vadd.f32 %v503, %v531
          %v560 = vadd.f32 %v504, %v540
          %v561 = vadd.f32 %v505, %v549
          %v562 = vadd.f32 %v506, %v558
          %v563 = vld [vmem:[%s420] sm:$0xff]
          %v564 = vadd.f32 %v559, %v560
          %v565 = vadd.f32 %v564, %v561
          %v566 = vadd.f32 %v565, %v562
          %v567 = vadd.f32 %v563, %v566
          %568 = vst [vmem:[%s420] sm:$0xff] %v567
          %v569 = vld [vmem:[%s401] sm:$0xff]
          %v570 = vld [vmem:[%s424] sm:$0xff]
          %v571 = vadd.f32 %v569, 0.0
          %v572 = vadd.f32 %v570, %v571
          %573 = vst [vmem:[%s424] sm:$0xff] %v572
        $region48: #{cu_loss.1} parent=31 // pred_fallthru
          _
        %p574 = scmp.lt.s32.totalorder %s26, 1
        %s575 = scalar_select %p574, %s26, 1
        %s576 = smul.addr %s575, 8
        %s577 = scalar_lea.vmem %s3, %s576
        %p578 = scmp.lt.s32.totalorder %s26, 1
        %s579 = scalar_select %p578, %s26, 1
        %s580 = smul.addr %s579, 8
        %s581 = scalar_lea.vmem %s4, %s580
        %p582 = scmp.lt.s32.totalorder %s26, 1
        %s583 = scalar_select %p582, %s26, 1
        %s584 = smul.addr %s583, 8
        %s585 = scalar_lea.vmem %s5, %s584
        %p586 = scmp.lt.s32.totalorder %s26, 1
        %s587 = scalar_select %p586, %s26, 1
        %s588 = smul.addr %s587, 8
        %s589 = scalar_lea.vmem %s6, %s588
        %p590 = scmp.lt.s32.totalorder %s26, 1
        %s591 = scalar_select %p590, %s26, 1
        %s592 = smul.addr %s591, 8
        %s593 = scalar_lea.vmem %s7, %s592
        // Predicated region
        $region49: #{cu_loss.1} parent=31 // pred_check
          %p594 = pneg %p144
        $region50: #{cu_loss.1} parent=31 // pred_check_branch
          %596 = sbr.rel (%p594) target = $region52
        $region51: #{cu_loss.1} parent=31 // pred_region
          _
        $region52: #{cu_loss.1} parent=31 // pred_fallthru
          _
        // Predicated region
        $region53: #{cu_loss.1} parent=31 // pred_check
          %p597 = pneg %p170
        $region54: #{cu_loss.1} parent=31 // pred_check_branch
          %599 = sbr.rel (%p597) target = $region56
        $region55: #{cu_loss.1} parent=31 // pred_region
          _
        $region56: #{cu_loss.1} parent=31 // pred_fallthru
          _
        // Predicated region
        $region57: #{cu_loss.1} parent=31 // pred_check
          %p600 = pneg %p196
        $region58: #{cu_loss.1} parent=31 // pred_check_branch
          %602 = sbr.rel (%p600) target = $region60
        $region59: #{cu_loss.1} parent=31 // pred_region
          _
        $region60: #{cu_loss.1} parent=31 // pred_fallthru
          _
        // Predicated region
        $region61: #{cu_loss.1} parent=31 // pred_check
          %p603 = pneg %p222
        $region62: #{cu_loss.1} parent=31 // pred_check_branch
          %605 = sbr.rel (%p603) target = $region64
        $region63: #{cu_loss.1} parent=31 // pred_region
          _
        $region64: #{cu_loss.1} parent=31 // pred_fallthru
          _
        // Predicated region
        $region65: #{cu_loss.1} parent=31 // pred_check
          %p606 = pneg %p248
        $region66: #{cu_loss.1} parent=31 // pred_check_branch
          %608 = sbr.rel (%p606) target = $region68
        $region67: #{cu_loss.1} parent=31 // pred_region
          _
        $region68: #{cu_loss.1} parent=31 // pred_fallthru
          _
      $region32: #{cu_loss.1} parent=5 // pred_fallthru
        _
      %p609 = scmp.le.s32.totalorder 2, %s17
      // Predicated region
      $region69: #{cu_loss.1} parent=5 // pred_check
        %p610 = pneg %p609
      $region70: #{cu_loss.1} parent=5 // pred_check_branch
        %612 = sbr.rel (%p610) target = $region72
      $region71: #{cu_loss.1} parent=5 // pred_region
        %s613 = ssub.s32 %s17, 2
        // Predicated region
        $region73: #{cu_loss.1} parent=71 // pred_check
          %p614 = pneg %p150
        $region74: #{cu_loss.1} parent=71 // pred_check_branch
          %616 = sbr.rel (%p614) target = $region76
        $region75: #{cu_loss.1} parent=71 // pred_region
          %p617 = scmp.lt.s32.totalorder %s28, 1
          %s618 = scalar_select %p617, %s28, 1
          %s619 = smul.addr %s618, 8
          %s620 = scalar_lea.vmem %s3, %s619
        $region76: #{cu_loss.1} parent=71 // pred_fallthru
          _
        // Predicated region
        $region77: #{cu_loss.1} parent=71 // pred_check
          %p621 = pneg %p176
        $region78: #{cu_loss.1} parent=71 // pred_check_branch
          %623 = sbr.rel (%p621) target = $region80
        $region79: #{cu_loss.1} parent=71 // pred_region
          %p624 = scmp.lt.s32.totalorder %s28, 1
          %s625 = scalar_select %p624, %s28, 1
          %s626 = smul.addr %s625, 8
          %s627 = scalar_lea.vmem %s4, %s626
        $region80: #{cu_loss.1} parent=71 // pred_fallthru
          _
        // Predicated region
        $region81: #{cu_loss.1} parent=71 // pred_check
          %p628 = pneg %p202
        $region82: #{cu_loss.1} parent=71 // pred_check_branch
          %630 = sbr.rel (%p628) target = $region84
        $region83: #{cu_loss.1} parent=71 // pred_region
          %p631 = scmp.lt.s32.totalorder %s28, 1
          %s632 = scalar_select %p631, %s28, 1
          %s633 = smul.addr %s632, 8
          %s634 = scalar_lea.vmem %s5, %s633
        $region84: #{cu_loss.1} parent=71 // pred_fallthru
          _
        // Predicated region
        $region85: #{cu_loss.1} parent=71 // pred_check
          %p635 = pneg %p228
        $region86: #{cu_loss.1} parent=71 // pred_check_branch
          %637 = sbr.rel (%p635) target = $region88
        $region87: #{cu_loss.1} parent=71 // pred_region
          %p638 = scmp.lt.s32.totalorder %s28, 1
          %s639 = scalar_select %p638, %s28, 1
          %s640 = smul.addr %s639, 8
          %s641 = scalar_lea.vmem %s6, %s640
        $region88: #{cu_loss.1} parent=71 // pred_fallthru
          _
        // Predicated region
        $region89: #{cu_loss.1} parent=71 // pred_check
          %p642 = pneg %p254
        $region90: #{cu_loss.1} parent=71 // pred_check_branch
          %644 = sbr.rel (%p642) target = $region92
        $region91: #{cu_loss.1} parent=71 // pred_region
          %p645 = scmp.lt.s32.totalorder %s28, 1
          %s646 = scalar_select %p645, %s28, 1
          %s647 = smul.addr %s646, 8
          %s648 = scalar_lea.vmem %s7, %s647
        $region92: #{cu_loss.1} parent=71 // pred_fallthru
          _
      $region72: #{cu_loss.1} parent=5 // pred_fallthru
        _
    $region6: #{cu_loss.1} parent=1 // loop_footer
      %s21 = sadd.s32 1, %s17
    $region7: #{cu_loss.1} parent=1 // loop_footer_branch
      %16 = sbr.rel target = $region3
    $region8: #{cu_loss.1} parent=1 // loop_exit
      _
    %649 = vsyncpa [#allocation3], 1
    %s650 = scalar_lea.sflag [#allocation3], 1
    %651 = vsyncpa %s650, 1

</llo_original>
